<compile_context>
chip_gen: v7x
topology: tpu7x:2x2x1
jax: 0.10.0
libtpu: 0.0.40
codegen_flags: <defaults>
</compile_context>

<pallas_src>
import functools

import jax
import jax.numpy as jnp
from jax.experimental import pallas as pl
from jax.experimental.pallas import tpu as pltpu

LANES = 128
MAX_TILE_ROWS = 4096  # (4096, 128) f32 = 2 MiB per block; x2 buffers = 4 MiB.


def _stats_kernel(n_ref, x_ref, out_ref, acc_sum, acc_max, acc_min, *, tile_rows):
    """Accumulates per-lane sum/max/min; out = [sum, mean, max, min] (SMEM)."""
    i = pl.program_id(0)
    n = n_ref[0]
    tile_elems = tile_rows * LANES

    @pl.when(i == 0)
    def _init():
        acc_sum[...] = jnp.zeros_like(acc_sum)
        acc_max[...] = jnp.full_like(acc_max, -jnp.inf)
        acc_min[...] = jnp.full_like(acc_min, jnp.inf)

    # A tile needs masking only if it is not entirely inside [0, n).
    needs_mask = (i + 1) * tile_elems > n

    @pl.when(jnp.logical_not(needs_mask))
    def _full_tile():  # fast path: no iota, no compares, no selects
        x = x_ref[...].astype(jnp.float32)
        acc_sum[...] += jnp.sum(x, axis=0, keepdims=True)
        acc_max[...] = jnp.maximum(acc_max[...],
                                   jnp.max(x, axis=0, keepdims=True))
        acc_min[...] = jnp.minimum(acc_min[...],
                                   jnp.min(x, axis=0, keepdims=True))

    @pl.when(needs_mask)
    def _ragged_tile():  # only the trailing tile(s) take this path
        x = x_ref[...].astype(jnp.float32)
        row = jax.lax.broadcasted_iota(jnp.int32, (tile_rows, LANES), 0)
        col = jax.lax.broadcasted_iota(jnp.int32, (tile_rows, LANES), 1)
        flat = i * tile_elems + row * LANES + col
        valid = flat < n
        acc_sum[...] += jnp.sum(jnp.where(valid, x, 0.0),
                                axis=0, keepdims=True)
        acc_max[...] = jnp.maximum(
            acc_max[...],
            jnp.max(jnp.where(valid, x, -jnp.inf), axis=0, keepdims=True))
        acc_min[...] = jnp.minimum(
            acc_min[...],
            jnp.min(jnp.where(valid, x, jnp.inf), axis=0, keepdims=True))

    @pl.when(i == pl.num_programs(0) - 1)
    def _finalize():  # single cross-lane reduce at the very end
        total = jnp.sum(acc_sum[...])
        out_ref[0] = total
        out_ref[1] = total / n.astype(jnp.float32)
        out_ref[2] = jnp.max(acc_max[...])
        out_ref[3] = jnp.min(acc_min[...])


@jax.jit
def _tensor_stats(x):
    """Returns f32[4] = [sum, mean, max, min] over all elements of x."""
    xf = jnp.reshape(x, (-1,))          # free (contiguous) reshape, native dtype
    n = xf.shape[0]
    rows = -(-n // LANES)
    padded = rows * LANES
    if padded != n:
        # Tail pad (< 128 elements of padding); masked out inside the kernel.
        xf = jnp.pad(xf, (0, padded - n))
    x2d = xf.reshape(rows, LANES)

    tile_rows = MAX_TILE_ROWS if rows >= MAX_TILE_ROWS else rows
    num_tiles = -(-rows // tile_rows)
    n_arr = jnp.array([n], dtype=jnp.int32)

    kernel = functools.partial(_stats_kernel, tile_rows=tile_rows)
    return pl.pallas_call(
        kernel,
        out_shape=jax.ShapeDtypeStruct((4,), jnp.float32),
        grid_spec=pltpu.PrefetchScalarGridSpec(
            num_scalar_prefetch=1,
            grid=(num_tiles,),
            in_specs=[
                pl.BlockSpec((tile_rows, LANES), lambda i, n_ref: (i, 0)),
            ],
            out_specs=pl.BlockSpec(memory_space=pltpu.MemorySpace.SMEM),
            scratch_shapes=[
                pltpu.VMEM((1, LANES), jnp.float32),  # sum accumulator
                pltpu.VMEM((1, LANES), jnp.float32),  # max accumulator
                pltpu.VMEM((1, LANES), jnp.float32),  # min accumulator
            ],
        ),
        compiler_params=pltpu.CompilerParams(
            dimension_semantics=("arbitrary",),
            vmem_limit_bytes=32 * 1024 * 1024,
        ),
    )(n_arr, x2d)


class PallasModule:
    """JAX/Pallas equivalent of PtModule: per-tensor (sum, mean, max, min)."""

    def forward(self, inputs):
        # Dispatch all reductions asynchronously; synchronize once at the end.
        stats = [_tensor_stats(t) for t in inputs]
        stats = jax.block_until_ready(stats)
        return [(float(s[0]), float(s[1]), float(s[2]), float(s[3]))
                for s in stats]


if __name__ == "__main__":
    key = jax.random.PRNGKey(0)
    k1, k2, k3, k4 = jax.random.split(key, 4)

    # Deterministic example inputs. Shapes cover: multiple-of-128 counts
    # (free reshape path), a non-multiple-of-128 count (tail-pad + mask),
    # and a multi-tile case with a ragged last tile.
    inputs = [
        jax.random.normal(k1, (2, 4, 16, 16), dtype=jnp.float32),
        jax.random.normal(k2, (8, 32), dtype=jnp.float32),
        jax.random.normal(k3, (5, 7, 3), dtype=jnp.float32),
        jax.random.normal(k4, (1200, 640), dtype=jnp.float32),
    ]

    module = PallasModule()
    results = module.forward(inputs)

    # Sanity check against a plain-JAX reference.
    ok = True
    for x, (s, m, mx, mn) in zip(inputs, results):
        nelem = x.size
        ref = (float(jnp.sum(x)), float(jnp.mean(x)),
               float(jnp.max(x)), float(jnp.min(x)))
        for got, exp in zip((s, m, mx, mn), ref):
            tol = 1e-3 * max(1.0, abs(exp)) + 1e-6 * nelem
            if abs(got - exp) > tol:
                ok = False

    if ok:
        print("KERNEL_OK")
    else:
        print("KERNEL_MISMATCH")
</pallas_src>

<mosaic_0001>
module attributes {stable_mosaic.version = 11 : i64} {
  func.func @_stats_kernel(%arg0: i32, %arg1: memref<1xi32, #tpu.memory_space<smem>>, %arg2: memref<16x128xf32, #tpu.memory_space<vmem>>, %arg3: memref<4xf32, #tpu.memory_space<smem>>, %arg4: memref<1x128xf32, #tpu.memory_space<vmem>>, %arg5: memref<1x128xf32, #tpu.memory_space<vmem>>, %arg6: memref<1x128xf32, #tpu.memory_space<vmem>>) attributes {dimension_semantics = [#tpu.dimension_semantics<arbitrary>], iteration_bounds = array<i64: 1>, scalar_prefetch = 1 : i64, scratch_operands = 3 : i64, tpu.core_type = #tpu.core_type<tc>, window_params = [{transform_indices = @transform_0, window_bounds = array<i64: 16, 128>}, {transform_indices = @transform_1, window_bounds = array<i64: 4>}]} {
    %c0 = arith.constant 0 : index
    %0 = memref.load %arg1[%c0] : memref<1xi32, #tpu.memory_space<smem>>
    %c0_i32 = arith.constant 0 : i32
    %1 = arith.cmpi eq, %arg0, %c0_i32 : i32
    %2 = arith.extui %1 : i1 to i32
    %c0_i32_0 = arith.constant 0 : i32
    %3 = arith.cmpi ne, %2, %c0_i32_0 : i32
    scf.if %3 {
      %cst = arith.constant 0.000000e+00 : f32
      %15 = vector.broadcast %cst : f32 to vector<1x128xf32>
      %c0_5 = arith.constant 0 : index
      %c0_6 = arith.constant 0 : index
      %16 = vector.load %arg4[%c0_5, %c0_6] : memref<1x128xf32, #tpu.memory_space<vmem>>, vector<1x128xf32>
      tpu.vector_store %arg4[%c0_5, %c0_6], %15 {strides = array<i32>} : memref<1x128xf32, #tpu.memory_space<vmem>>, vector<1x128xf32>,
      %cst_7 = arith.constant 0xFF800000 : f32
      %17 = vector.broadcast %cst_7 : f32 to vector<1x128xf32>
      %c0_8 = arith.constant 0 : index
      %c0_9 = arith.constant 0 : index
      %18 = vector.load %arg5[%c0_8, %c0_9] : memref<1x128xf32, #tpu.memory_space<vmem>>, vector<1x128xf32>
      tpu.vector_store %arg5[%c0_8, %c0_9], %17 {strides = array<i32>} : memref<1x128xf32, #tpu.memory_space<vmem>>, vector<1x128xf32>,
      %cst_10 = arith.constant 0x7F800000 : f32
      %19 = vector.broadcast %cst_10 : f32 to vector<1x128xf32>
      %c0_11 = arith.constant 0 : index
      %c0_12 = arith.constant 0 : index
      %20 = vector.load %arg6[%c0_11, %c0_12] : memref<1x128xf32, #tpu.memory_space<vmem>>, vector<1x128xf32>
      tpu.vector_store %arg6[%c0_11, %c0_12], %19 {strides = array<i32>} : memref<1x128xf32, #tpu.memory_space<vmem>>, vector<1x128xf32>,
    } else {
    }
    %c1_i32 = arith.constant 1 : i32
    %4 = arith.addi %arg0, %c1_i32 : i32
    %c2048_i32 = arith.constant 2048 : i32
    %5 = arith.muli %4, %c2048_i32 : i32
    %6 = arith.cmpi sgt, %5, %0 : i32
    %true = arith.constant true
    %7 = arith.xori %6, %true : i1
    %8 = arith.extui %7 : i1 to i32
    %c0_i32_1 = arith.constant 0 : i32
    %9 = arith.cmpi ne, %8, %c0_i32_1 : i32
    scf.if %9 {
      %c0_5 = arith.constant 0 : index
      %c0_6 = arith.constant 0 : index
      %15 = vector.load %arg2[%c0_5, %c0_6] : memref<16x128xf32, #tpu.memory_space<vmem>>, vector<16x128xf32>
      %c0_7 = arith.constant 0 : index
      %c0_8 = arith.constant 0 : index
      %16 = vector.load %arg4[%c0_7, %c0_8] : memref<1x128xf32, #tpu.memory_space<vmem>>, vector<1x128xf32>
      %cst = arith.constant dense<0.000000e+00> : vector<128xf32>
      %17 = vector.multi_reduction <add>, %15, %cst [0] : vector<16x128xf32> to vector<128xf32>
      %18 = vector.shape_cast %17 : vector<128xf32> to vector<1x128xf32>
      %19 = arith.addf %16, %18 : vector<1x128xf32>
      %c0_9 = arith.constant 0 : index
      %c0_10 = arith.constant 0 : index
      %20 = vector.load %arg4[%c0_9, %c0_10] : memref<1x128xf32, #tpu.memory_space<vmem>>, vector<1x128xf32>
      tpu.vector_store %arg4[%c0_9, %c0_10], %19 {strides = array<i32>} : memref<1x128xf32, #tpu.memory_space<vmem>>, vector<1x128xf32>,
      %c0_11 = arith.constant 0 : index
      %c0_12 = arith.constant 0 : index
      %21 = vector.load %arg5[%c0_11, %c0_12] : memref<1x128xf32, #tpu.memory_space<vmem>>, vector<1x128xf32>
      %cst_13 = arith.constant dense<0xFF800000> : vector<128xf32>
      %22 = vector.multi_reduction <maximumf>, %15, %cst_13 [0] : vector<16x128xf32> to vector<128xf32>
      %23 = vector.shape_cast %22 : vector<128xf32> to vector<1x128xf32>
      %24 = arith.maximumf %21, %23 : vector<1x128xf32>
      %c0_14 = arith.constant 0 : index
      %c0_15 = arith.constant 0 : index
      %25 = vector.load %arg5[%c0_14, %c0_15] : memref<1x128xf32, #tpu.memory_space<vmem>>, vector<1x128xf32>
      tpu.vector_store %arg5[%c0_14, %c0_15], %24 {strides = array<i32>} : memref<1x128xf32, #tpu.memory_space<vmem>>, vector<1x128xf32>,
      %c0_16 = arith.constant 0 : index
      %c0_17 = arith.constant 0 : index
      %26 = vector.load %arg6[%c0_16, %c0_17] : memref<1x128xf32, #tpu.memory_space<vmem>>, vector<1x128xf32>
      %cst_18 = arith.constant dense<0x7F800000> : vector<128xf32>
      %27 = vector.multi_reduction <minimumf>, %15, %cst_18 [0] : vector<16x128xf32> to vector<128xf32>
      %28 = vector.shape_cast %27 : vector<128xf32> to vector<1x128xf32>
      %29 = arith.minimumf %26, %28 : vector<1x128xf32>
      %c0_19 = arith.constant 0 : index
      %c0_20 = arith.constant 0 : index
      %30 = vector.load %arg6[%c0_19, %c0_20] : memref<1x128xf32, #tpu.memory_space<vmem>>, vector<1x128xf32>
      tpu.vector_store %arg6[%c0_19, %c0_20], %29 {strides = array<i32>} : memref<1x128xf32, #tpu.memory_space<vmem>>, vector<1x128xf32>,
    } else {
    }
    %10 = arith.extui %6 : i1 to i32
    %c0_i32_2 = arith.constant 0 : i32
    %11 = arith.cmpi ne, %10, %c0_i32_2 : i32
    scf.if %11 {
      %c0_5 = arith.constant 0 : index
      %c0_6 = arith.constant 0 : index
      %15 = vector.load %arg2[%c0_5, %c0_6] : memref<16x128xf32, #tpu.memory_space<vmem>>, vector<16x128xf32>
      %16 = tpu.iota {dimensions = array<i32: 0>} : vector<16x128xi32>
      %17 = tpu.iota {dimensions = array<i32: 1>} : vector<16x128xi32>
      %c2048_i32_7 = arith.constant 2048 : i32
      %18 = arith.muli %arg0, %c2048_i32_7 : i32
      %c128_i32 = arith.constant 128 : i32
      %19 = vector.broadcast %c128_i32 : i32 to vector<16x128xi32>
      %20 = arith.muli %16, %19 : vector<16x128xi32>
      %21 = vector.broadcast %18 : i32 to vector<16x128xi32>
      %22 = arith.addi %21, %20 : vector<16x128xi32>
      %23 = arith.addi %22, %17 : vector<16x128xi32>
      %24 = vector.broadcast %0 : i32 to vector<16x128xi32>
      %25 = arith.cmpi slt, %23, %24 : vector<16x128xi32>
      %c0_8 = arith.constant 0 : index
      %c0_9 = arith.constant 0 : index
      %26 = vector.load %arg4[%c0_8, %c0_9] : memref<1x128xf32, #tpu.memory_space<vmem>>, vector<1x128xf32>
      %cst = arith.constant 0.000000e+00 : f32
      %27 = vector.broadcast %cst : f32 to vector<16x128xf32>
      %28 = arith.select %25, %15, %27 : vector<16x128xi1>, vector<16x128xf32>
      %cst_10 = arith.constant dense<0.000000e+00> : vector<128xf32>
      %29 = vector.multi_reduction <add>, %28, %cst_10 [0] : vector<16x128xf32> to vector<128xf32>
      %30 = vector.shape_cast %29 : vector<128xf32> to vector<1x128xf32>
      %31 = arith.addf %26, %30 : vector<1x128xf32>
      %c0_11 = arith.constant 0 : index
      %c0_12 = arith.constant 0 : index
      %32 = vector.load %arg4[%c0_11, %c0_12] : memref<1x128xf32, #tpu.memory_space<vmem>>, vector<1x128xf32>
      tpu.vector_store %arg4[%c0_11, %c0_12], %31 {strides = array<i32>} : memref<1x128xf32, #tpu.memory_space<vmem>>, vector<1x128xf32>,
      %c0_13 = arith.constant 0 : index
      %c0_14 = arith.constant 0 : index
      %33 = vector.load %arg5[%c0_13, %c0_14] : memref<1x128xf32, #tpu.memory_space<vmem>>, vector<1x128xf32>
      %cst_15 = arith.constant 0xFF800000 : f32
      %34 = vector.broadcast %cst_15 : f32 to vector<16x128xf32>
      %35 = arith.select %25, %15, %34 : vector<16x128xi1>, vector<16x128xf32>
      %cst_16 = arith.constant dense<0xFF800000> : vector<128xf32>
      %36 = vector.multi_reduction <maximumf>, %35, %cst_16 [0] : vector<16x128xf32> to vector<128xf32>
      %37 = vector.shape_cast %36 : vector<128xf32> to vector<1x128xf32>
      %38 = arith.maximumf %33, %37 : vector<1x128xf32>
      %c0_17 = arith.constant 0 : index
      %c0_18 = arith.constant 0 : index
      %39 = vector.load %arg5[%c0_17, %c0_18] : memref<1x128xf32, #tpu.memory_space<vmem>>, vector<1x128xf32>
      tpu.vector_store %arg5[%c0_17, %c0_18], %38 {strides = array<i32>} : memref<1x128xf32, #tpu.memory_space<vmem>>, vector<1x128xf32>,
      %c0_19 = arith.constant 0 : index
      %c0_20 = arith.constant 0 : index
      %40 = vector.load %arg6[%c0_19, %c0_20] : memref<1x128xf32, #tpu.memory_space<vmem>>, vector<1x128xf32>
      %cst_21 = arith.constant 0x7F800000 : f32
      %41 = vector.broadcast %cst_21 : f32 to vector<16x128xf32>
      %42 = arith.select %25, %15, %41 : vector<16x128xi1>, vector<16x128xf32>
      %cst_22 = arith.constant dense<0x7F800000> : vector<128xf32>
      %43 = vector.multi_reduction <minimumf>, %42, %cst_22 [0] : vector<16x128xf32> to vector<128xf32>
      %44 = vector.shape_cast %43 : vector<128xf32> to vector<1x128xf32>
      %45 = arith.minimumf %40, %44 : vector<1x128xf32>
      %c0_23 = arith.constant 0 : index
      %c0_24 = arith.constant 0 : index
      %46 = vector.load %arg6[%c0_23, %c0_24] : memref<1x128xf32, #tpu.memory_space<vmem>>, vector<1x128xf32>
      tpu.vector_store %arg6[%c0_23, %c0_24], %45 {strides = array<i32>} : memref<1x128xf32, #tpu.memory_space<vmem>>, vector<1x128xf32>,
    } else {
    }
    %c0_i32_3 = arith.constant 0 : i32
    %12 = arith.cmpi eq, %arg0, %c0_i32_3 : i32
    %13 = arith.extui %12 : i1 to i32
    %c0_i32_4 = arith.constant 0 : i32
    %14 = arith.cmpi ne, %13, %c0_i32_4 : i32
    scf.if %14 {
      %c0_5 = arith.constant 0 : index
      %c0_6 = arith.constant 0 : index
      %15 = vector.load %arg4[%c0_5, %c0_6] : memref<1x128xf32, #tpu.memory_space<vmem>>, vector<1x128xf32>
      %16 = vector.shape_cast %15 : vector<1x128xf32> to vector<1x1x128xf32>
      %cst = arith.constant dense<0.000000e+00> : vector<1xf32>
      %17 = vector.multi_reduction <add>, %16, %cst [1, 2] : vector<1x1x128xf32> to vector<1xf32>
      %18 = vector.shape_cast %17 : vector<1xf32> to vector<1x1x1xf32>
      %19 = vector.extract %18[0, 0, 0] : f32 from vector<1x1x1xf32>
      %c0_7 = arith.constant 0 : index
      %20 = memref.load %arg3[%c0_7] : memref<4xf32, #tpu.memory_space<smem>>
      memref.store %19, %arg3[%c0_7] : memref<4xf32, #tpu.memory_space<smem>>
      %21 = arith.sitofp %0 : i32 to f32
      %22 = arith.divf %19, %21 : f32
      %c1 = arith.constant 1 : index
      %23 = memref.load %arg3[%c1] : memref<4xf32, #tpu.memory_space<smem>>
      memref.store %22, %arg3[%c1] : memref<4xf32, #tpu.memory_space<smem>>
      %c0_8 = arith.constant 0 : index
      %c0_9 = arith.constant 0 : index
      %24 = vector.load %arg5[%c0_8, %c0_9] : memref<1x128xf32, #tpu.memory_space<vmem>>, vector<1x128xf32>
      %25 = vector.shape_cast %24 : vector<1x128xf32> to vector<1x1x128xf32>
      %cst_10 = arith.constant dense<0xFF800000> : vector<1xf32>
      %26 = vector.multi_reduction <maximumf>, %25, %cst_10 [1, 2] : vector<1x1x128xf32> to vector<1xf32>
      %27 = vector.shape_cast %26 : vector<1xf32> to vector<1x1x1xf32>
      %28 = vector.extract %27[0, 0, 0] : f32 from vector<1x1x1xf32>
      %c2 = arith.constant 2 : index
      %29 = memref.load %arg3[%c2] : memref<4xf32, #tpu.memory_space<smem>>
      memref.store %28, %arg3[%c2] : memref<4xf32, #tpu.memory_space<smem>>
      %c0_11 = arith.constant 0 : index
      %c0_12 = arith.constant 0 : index
      %30 = vector.load %arg6[%c0_11, %c0_12] : memref<1x128xf32, #tpu.memory_space<vmem>>, vector<1x128xf32>
      %31 = vector.shape_cast %30 : vector<1x128xf32> to vector<1x1x128xf32>
      %cst_13 = arith.constant dense<0x7F800000> : vector<1xf32>
      %32 = vector.multi_reduction <minimumf>, %31, %cst_13 [1, 2] : vector<1x1x128xf32> to vector<1xf32>
      %33 = vector.shape_cast %32 : vector<1xf32> to vector<1x1x1xf32>
      %34 = vector.extract %33[0, 0, 0] : f32 from vector<1x1x1xf32>
      %c3 = arith.constant 3 : index
      %35 = memref.load %arg3[%c3] : memref<4xf32, #tpu.memory_space<smem>>
      memref.store %34, %arg3[%c3] : memref<4xf32, #tpu.memory_space<smem>>
    } else {
    }
    return
  }
  func.func @transform_0(%arg0: i32, %arg1: memref<1xi32, #tpu.memory_space<smem>>) -> (i32, i32) {
    %c0_i32 = arith.constant 0 : i32
    %c0_i32_0 = arith.constant 0 : i32
    return %arg0, %c0_i32 : i32, i32
  }
  func.func @transform_1(%arg0: i32, %arg1: memref<1xi32, #tpu.memory_space<smem>>) -> i32 {
    %c0_i32 = arith.constant 0 : i32
    %c0_i32_0 = arith.constant 0 : i32
    return %c0_i32 : i32
  }
}

</mosaic_0001>

<llo_original>
// kernel: _tensor_stats.1
$region0: #{_tensor_stats.1}
  #allocation0 [shape = 'u32[]', space=smem, size = 0x4, offset = 0x4, fixed_abs, tag = 'smem constant byte address 0x4 - core index']
  #allocation1 [shape = 'u32[144,128]{1,0:T(1,128)}', space=vmem, size = 0x12000, scoped, tag = 'internal scratch']
  #allocation2 [shape = 'f32[1,128]{1,0:T(1,128)}', space=vmem, size = 0x200, scoped, tag = 'scratch operand']
  #allocation3 [shape = 'f32[1,128]{1,0:T(1,128)}', space=vmem, size = 0x200, scoped, tag = 'scratch operand']
  #allocation4 [shape = 'f32[1,128]{1,0:T(1,128)}', space=vmem, size = 0x200, scoped, tag = 'scratch operand']
  #allocation5 [shape = 's32[1]{0}', space=sflag, size = 0x4, scoped, tag = 'scoped memory for _tensor_stats.1']
  #allocation6 [shape = 's32[1]{0:T(128)S(6)}', space=smem, size = 0x200, scoped, tag = 'prefetched SMEM operand 0']
  %s0 = inlined_call_operand.<no memory space> [shape: s32[1], index: 0, kind: input, shape index: {}]
  %s1 = inlined_call_operand.vmem [shape: f32[16,128], index: 1, kind: input, shape index: {}]
  %s2 = inlined_call_operand.hbm [shape: f32[4], index: 2, kind: output, shape index: {}]
  %s3 = sld [smem:[#allocation0]]
  $region30: #{_tensor_stats.1} parent=0
    _
  %s5 = ssub.s32 1, %s3
  %s6 = scalar_select 0, %s5, %s3
  %7 = sst [smem:[#allocation6]] %s0
  $region1: #{_tensor_stats.1} parent=0
    #allocation7 [shape = 'u8[512]{0}', space=smem, size = 0x200, scoped, tag = 'output window, operand 0, single buffered']
    #allocation8 [shape = 's32[1]{0}', space=sflag, size = 0x4, scoped, tag = 'scoped memory for _tensor_stats.1']
    %8 = vsyncpa [#allocation8], 0
    // Predicated region
    $region2: #{_tensor_stats.1} parent=1 // pred_check
      _
    $region3: #{_tensor_stats.1} parent=1 // pred_check_branch
      %10 = sbr.rel (0) target = $region5
    $region4: #{_tensor_stats.1} parent=1 // pred_region
      _
    $region5: #{_tensor_stats.1} parent=1 // pred_fallthru
      _
    %s11 = sld [smem:[#allocation6]]
    %p12 = scmp.eq.s32.totalorder 0, 0
    // Predicated region
    $region6: #{_tensor_stats.1} parent=1 // pred_check
      %p13 = pneg %p12
    $region7: #{_tensor_stats.1} parent=1 // pred_check_branch
      %15 = sbr.rel (%p13) target = $region9
    $region8: #{_tensor_stats.1} parent=1 // pred_region
      %16 = vst [vmem:[#allocation2] sm:$0x1] 0.0
      %17 = vst [vmem:[#allocation3] sm:$0x1] -inf
      %18 = vst [vmem:[#allocation4] sm:$0x1] inf
    $region9: #{_tensor_stats.1} parent=1 // pred_fallthru
      _
    %s19 = sadd.s32 0, 1
    %s20 = smul.u32 %s19, 2048
    %p21 = scmp.gt.s32.totalorder %s20, %s11
    %p22 = scmp.le.s32.totalorder %s20, %s11
    // Predicated region
    $region10: #{_tensor_stats.1} parent=1 // pred_check
      %p23 = pneg %p22
    $region11: #{_tensor_stats.1} parent=1 // pred_check_branch
      %25 = sbr.rel (%p23) target = $region13
    $region12: #{_tensor_stats.1} parent=1 // pred_region
      %v26 = vld [vmem:[%s1] sm:$0xff]
      %v27 = vld [vmem:[%s1 + $0x8] sm:$0xff]
      %v28 = vld [vmem:[#allocation2] sm:$0x1]
      %v29 = vadd.f32 %v26, %v27
      %v30 = vrot.slane %v29, 4
      %v31 = vadd.f32 %v29, %v30
      %v32 = vrot.slane %v31, 2
      %v33 = vadd.f32 %v31, %v32
      %v34 = vrot.slane %v33, 1
      %v35 = vadd.f32 %v33, %v34
      %v36 = vadd.f32 %v28, %v35
      %37 = vst [vmem:[#allocation2] sm:$0x1] %v36
      %v38 = vld [vmem:[#allocation3] sm:$0x1]
      %v39 = vmax.f32 %v26, %v27
      %v40 = vrot.slane %v39, 4
      %v41 = vmax.f32 %v39, %v40
      %v42 = vrot.slane %v41, 2
      %v43 = vmax.f32 %v41, %v42
      %v44 = vrot.slane %v43, 1
      %v45 = vmax.f32 %v43, %v44
      %v46 = vmax.f32 %v38, %v45
      %47 = vst [vmem:[#allocation3] sm:$0x1] %v46
      %v48 = vld [vmem:[#allocation4] sm:$0x1]
      %v49 = vmin.f32 %v26, %v27
      %v50 = vrot.slane %v49, 4
      %v51 = vmin.f32 %v49, %v50
      %v52 = vrot.slane %v51, 2
      %v53 = vmin.f32 %v51, %v52
      %v54 = vrot.slane %v53, 1
      %v55 = vmin.f32 %v53, %v54
      %v56 = vmin.f32 %v48, %v55
      %57 = vst [vmem:[#allocation4] sm:$0x1] %v56
    $region13: #{_tensor_stats.1} parent=1 // pred_fallthru
      _
    // Predicated region
    $region14: #{_tensor_stats.1} parent=1 // pred_check
      %p58 = pneg %p21
    $region15: #{_tensor_stats.1} parent=1 // pred_check_branch
      %60 = sbr.rel (%p58) target = $region17
    $region16: #{_tensor_stats.1} parent=1 // pred_region
      %v61 = vld [vmem:[%s1] sm:$0xff]
      %v62 = vld [vmem:[%s1 + $0x8] sm:$0xff]
      %v63 = vlaneseq
      %v64 = vshrl.u32 %v63, 7
      %v65 = vadd.s32 %v64, 8
      %v66 = vlaneseq
      %v67 = vand.u32 %v66, 127
      %s68 = smul.u32 0, 2048
      %v69 = vmul.u32 %v64, 128
      %v70 = vmul.u32 %v65, 128
      %v71 = vstv %s68
      %v72 = vadd.s32 %v71, %v69
      %v73 = vadd.s32 %v71, %v70
      %v74 = vadd.s32 %v72, %v67
      %v75 = vadd.s32 %v73, %v67
      %v76 = vstv %s11
      %vm77 = vcmp.lt.s32.totalorder %v74, %v76
      %vm78 = vcmp.lt.s32.totalorder %v75, %v76
      %v79 = vld [vmem:[#allocation2] sm:$0x1]
      %v80 = vsel %vm77, %v61, 0.0
      %v81 = vsel %vm78, %v62, 0.0
      %v82 = vadd.f32 %v80, %v81
      %v83 = vrot.slane %v82, 4
      %v84 = vadd.f32 %v82, %v83
      %v85 = vrot.slane %v84, 2
      %v86 = vadd.f32 %v84, %v85
      %v87 = vrot.slane %v86, 1
      %v88 = vadd.f32 %v86, %v87
      %v89 = vadd.f32 %v79, %v88
      %90 = vst [vmem:[#allocation2] sm:$0x1] %v89
      %v91 = vld [vmem:[#allocation3] sm:$0x1]
      %v92 = vsel %vm77, %v61, -inf
      %v93 = vsel %vm78, %v62, -inf
      %v94 = vmax.f32 %v92, %v93
      %v95 = vrot.slane %v94, 4
      %v96 = vmax.f32 %v94, %v95
      %v97 = vrot.slane %v96, 2
      %v98 = vmax.f32 %v96, %v97
      %v99 = vrot.slane %v98, 1
      %v100 = vmax.f32 %v98, %v99
      %v101 = vmax.f32 %v91, %v100
      %102 = vst [vmem:[#allocation3] sm:$0x1] %v101
      %v103 = vld [vmem:[#allocation4] sm:$0x1]
      %v104 = vsel %vm77, %v61, inf
      %v105 = vsel %vm78, %v62, inf
      %v106 = vmin.f32 %v104, %v105
      %v107 = vrot.slane %v106, 4
      %v108 = vmin.f32 %v106, %v107
      %v109 = vrot.slane %v108, 2
      %v110 = vmin.f32 %v108, %v109
      %v111 = vrot.slane %v110, 1
      %v112 = vmin.f32 %v110, %v111
      %v113 = vmin.f32 %v103, %v112
      %114 = vst [vmem:[#allocation4] sm:$0x1] %v113
    $region17: #{_tensor_stats.1} parent=1 // pred_fallthru
      _
    // Predicated region
    $region18: #{_tensor_stats.1} parent=1 // pred_check
      %p115 = pneg %p12
    $region19: #{_tensor_stats.1} parent=1 // pred_check_branch
      %117 = sbr.rel (%p115) target = $region21
    $region20: #{_tensor_stats.1} parent=1 // pred_region
      %v118 = vld [vmem:[#allocation2] sm:$0x1]
      %vm119 = vcmask 1040384
      %v120 = vsel %vm119, %v118, 0.0
      %121 = vadd.xlane.f32.xlu0 %v120
      %v122 = vpop.xlane.xlu0 %121
      %v123 = vrot.slane %v122, 4
      %v124 = vadd.f32 %v122, %v123
      %v125 = vrot.slane %v124, 2
      %v126 = vadd.f32 %v124, %v125
      %v127 = vrot.slane %v126, 1
      %v128 = vadd.f32 %v126, %v127
      %s129 = vtos %v128
      %s130 = scalar_lea.smem [#allocation7], 0
      %131 = sst [smem:[%s130]] %s129
      %s132 = scvt.s32.f32 %s11
      %v133 = vstv %s132
      %v134 = vrcp.pop %v133
      %s135 = vtos %v134
      %s136 = smul.f32 %s129, %s135
      %s137 = scalar_lea.smem [#allocation7], 1
      %138 = sst [smem:[%s137]] %s136
      %v139 = vld [vmem:[#allocation3] sm:$0x1]
      %v140 = vsel %vm119, %v139, -inf
      %141 = vmax.xlane.f32.xlu0 %v140
      %v142 = vpop.xlane.xlu0 %141
      %v143 = vrot.slane %v142, 4
      %v144 = vmax.f32 %v142, %v143
      %v145 = vrot.slane %v144, 2
      %v146 = vmax.f32 %v144, %v145
      %v147 = vrot.slane %v146, 1
      %v148 = vmax.f32 %v146, %v147
      %s149 = vtos %v148
      %s150 = scalar_lea.smem [#allocation7], 2
      %151 = sst [smem:[%s150]] %s149
      %v152 = vld [vmem:[#allocation4] sm:$0x1]
      %v153 = vsel %vm119, %v152, inf
      %154 = vmin.xlane.f32.xlu0 %v153
      %v155 = vpop.xlane.xlu0 %154
      %v156 = vrot.slane %v155, 4
      %v157 = vmin.f32 %v155, %v156
      %v158 = vrot.slane %v157, 2
      %v159 = vmin.f32 %v157, %v158
      %v160 = vrot.slane %v159, 1
      %v161 = vmin.f32 %v159, %v160
      %s162 = vtos %v161
      %s163 = scalar_lea.smem [#allocation7], 3
      %164 = sst [smem:[%s163]] %s162
    $region21: #{_tensor_stats.1} parent=1 // pred_fallthru
      _
    // Predicated region
    $region22: #{_tensor_stats.1} parent=1 // pred_check
      _
    $region23: #{_tensor_stats.1} parent=1 // pred_check_branch
      %166 = sbr.rel (0) target = $region25
    $region24: #{_tensor_stats.1} parent=1 // pred_region
      %s168 = ssub.s32 16, 16
      %169 = vsyncadd [#allocation8], %s168
      %172 = dma.smem_to_hbm [#allocation7], 16, %s2, [#allocation8]
    $region25: #{_tensor_stats.1} parent=1 // pred_fallthru
      _
    // Predicated region
    $region26: #{_tensor_stats.1} parent=1 // pred_check
      _
    $region27: #{_tensor_stats.1} parent=1 // pred_check_branch
      %174 = sbr.rel (0) target = $region29
    $region28: #{_tensor_stats.1} parent=1 // pred_region
      %175 = dma.done [#allocation8], 16
    $region29: #{_tensor_stats.1} parent=1 // pred_fallthru
      _
    %176 = sfence
    %177 = vsyncpa [#allocation8], 1

</llo_original>
